<compile_context>
chip_gen: v6e
topology: v6e:2x2x1
jax: 0.10.0
libtpu: 0.0.40
codegen_flags: <defaults>
</compile_context>

<pallas_src>
import jax
import jax.numpy as jnp
from jax.experimental import pallas as pl
from jax.experimental.pallas import tpu as pltpu

_LANE = 512            # lane-dense width (multiple of 128) -> unmasked vst
_TILE_BYTES = 4 << 20  # ~4 MiB per tile, independent of dtype
_MIN_GRID_STEPS = 8    # keep pipeline + v7x 2-TC split busy for medium sizes
_VMEM_LIMIT = 32 << 20 # explicit scoped-VMEM budget, safe on v5e/v6e/v7x


def _round_up(v, m):
    return ((v + m - 1) // m) * m


def _h_sigmoid_kernel(x_ref, o_ref):
    x = x_ref[...]
    three = jnp.asarray(3.0, x.dtype)
    zero = jnp.asarray(0.0, x.dtype)
    six = jnp.asarray(6.0, x.dtype)
    # relu6(x + 3) / 6  ==  clamp(x + 3, 0, 6) / 6
    o_ref[...] = jnp.clip(x + three, zero, six) / six


def _h_sigmoid_jnp(x):
    # Same math, used only for tiny tensors / the unaligned (<_LANE) tail.
    return jnp.clip(x + jnp.asarray(3.0, x.dtype),
                    jnp.asarray(0.0, x.dtype),
                    jnp.asarray(6.0, x.dtype)) / jnp.asarray(6.0, x.dtype)


def _run_kernel_2d(x2d):
    """Run the Pallas kernel over a lane-dense (rows, _LANE) view."""
    rows, lane = x2d.shape
    dtype = x2d.dtype
    itemsize = jnp.dtype(dtype).itemsize
    pack = max(8, 32 // itemsize)                     # f32:8  bf16:16  int8:32
    max_block_rows = max(pack, _TILE_BYTES // (lane * itemsize))

    if rows <= max_block_rows and rows % pack != 0:
        # Small / oddly-sized row count: one full-extent block (allowed even
        # when rows is not a multiple of the sublane pack).
        block_rows = rows
    else:
        # Aim for >= _MIN_GRID_STEPS pipelined steps, cap tile at ~4 MiB,
        # keep block_rows pack-aligned; partial last block is masked by Pallas.
        block_rows = min(
            max_block_rows,
            max(pack, _round_up(pl.cdiv(rows, _MIN_GRID_STEPS), pack)))
    grid_rows = pl.cdiv(rows, block_rows)

    n = rows * lane
    cost = pl.CostEstimate(
        flops=3 * n,                      # add + clamp + divide
        transcendentals=0,
        bytes_accessed=2 * n * itemsize,  # read + write (HBM-bound)
    )

    return pl.pallas_call(
        _h_sigmoid_kernel,
        out_shape=jax.ShapeDtypeStruct((rows, lane), dtype),
        grid_spec=pl.GridSpec(
            grid=(grid_rows,),
            in_specs=[pl.BlockSpec((block_rows, lane), lambda i: (i, 0))],
            out_specs=pl.BlockSpec((block_rows, lane), lambda i: (i, 0)),
        ),
        compiler_params=pltpu.CompilerParams(
            dimension_semantics=("parallel",),
            vmem_limit_bytes=_VMEM_LIMIT),
        cost_estimate=cost,
    )(x2d)


def h_sigmoid(x):
    """Elementwise hard-sigmoid matching torch: relu6(x + 3) / 6."""
    orig_shape = x.shape
    n = x.size
    if n == 0:
        return x

    if n % _LANE == 0:
        # Fast path: pure reshape in/out, no pad or slice copies.
        out = _run_kernel_2d(x.reshape(n // _LANE, _LANE))
        return out.reshape(orig_shape)

    if n < _LANE:
        # Tiny tensor: kernel-launch overhead would dominate; fused jnp op.
        return _h_sigmoid_jnp(x)

    # Unaligned size: run the aligned bulk through the kernel and only the
    # (<_LANE-elem) tail with plain jnp, instead of copying the whole tensor.
    x_flat = x.reshape(-1)
    n_bulk = (n // _LANE) * _LANE
    bulk_out = _run_kernel_2d(x_flat[:n_bulk].reshape(n_bulk // _LANE, _LANE))
    tail_out = _h_sigmoid_jnp(x_flat[n_bulk:])
    return jnp.concatenate([bulk_out.reshape(-1), tail_out]).reshape(orig_shape)


def _ref(x):
    return jnp.clip(x + 3.0, 0.0, 6.0) / 6.0


if __name__ == "__main__":
    key = jax.random.PRNGKey(0)

    # Primary (module-consistent small NCHW shape): batch=2, channels=4, 16x16.
    x_small = jax.random.normal(key, (2, 4, 16, 16), dtype=jnp.float32) * 4.0
    y_small = jax.block_until_ready(h_sigmoid(x_small))
    assert y_small.shape == x_small.shape and y_small.dtype == x_small.dtype
    assert jnp.max(jnp.abs(y_small - _ref(x_small))) < 1e-6

    # Aligned multi-tile path: 1296 rows -> ~8 pipelined grid steps.
    k2 = jax.random.PRNGKey(1)
    x_big = jax.random.normal(k2, (2, 16, 144, 144), dtype=jnp.float32) * 4.0
    y_big = jax.block_until_ready(h_sigmoid(x_big))
    assert y_big.shape == x_big.shape and y_big.dtype == x_big.dtype
    assert jnp.max(jnp.abs(y_big - _ref(x_big))) < 1e-6

    # Unaligned size (n % 512 != 0): kernel bulk + jnp tail, no full-tensor pad.
    k3 = jax.random.PRNGKey(2)
    x_odd = jax.random.normal(k3, (3, 5, 7, 11), dtype=jnp.float32) * 4.0
    y_odd = jax.block_until_ready(h_sigmoid(x_odd))
    assert y_odd.shape == x_odd.shape and y_odd.dtype == x_odd.dtype
    assert jnp.max(jnp.abs(y_odd - _ref(x_odd))) < 1e-6

    print("KERNEL_OK")
</pallas_src>

<mosaic_0001>
module attributes {stable_mosaic.version = 11 : i64} {
  func.func @_h_sigmoid_kernel(%arg0: i32, %arg1: memref<4x512xf32, #tpu.memory_space<vmem>>, %arg2: memref<4x512xf32, #tpu.memory_space<vmem>>) attributes {dimension_semantics = [#tpu.dimension_semantics<parallel>], iteration_bounds = array<i64: 1>, scalar_prefetch = 0 : i64, scratch_operands = 0 : i64, tpu.core_type = #tpu.core_type<tc>, window_params = [{transform_indices = @transform_0, window_bounds = array<i64: 4, 512>}, {transform_indices = @transform_1, window_bounds = array<i64: 4, 512>}]} {
    %c0 = arith.constant 0 : index
    %c0_0 = arith.constant 0 : index
    %0 = vector.load %arg1[%c0, %c0_0] : memref<4x512xf32, #tpu.memory_space<vmem>>, vector<4x512xf32>
    %cst = arith.constant 3.000000e+00 : f32
    %1 = vector.broadcast %cst : f32 to vector<4x512xf32>
    %2 = arith.addf %0, %1 : vector<4x512xf32>
    %cst_1 = arith.constant 0.000000e+00 : f32
    %cst_2 = arith.constant 6.000000e+00 : f32
    %3 = vector.broadcast %cst_1 : f32 to vector<4x512xf32>
    %4 = arith.maximumf %3, %2 : vector<4x512xf32>
    %5 = vector.broadcast %cst_2 : f32 to vector<4x512xf32>
    %6 = arith.minimumf %5, %4 : vector<4x512xf32>
    %cst_3 = arith.constant 6.000000e+00 : f32
    %7 = vector.broadcast %cst_3 : f32 to vector<4x512xf32>
    %8 = arith.divf %6, %7 : vector<4x512xf32>
    %c0_4 = arith.constant 0 : index
    %c0_5 = arith.constant 0 : index
    %9 = vector.load %arg2[%c0_4, %c0_5] : memref<4x512xf32, #tpu.memory_space<vmem>>, vector<4x512xf32>
    tpu.vector_store %arg2[%c0_4, %c0_5], %8 {strides = array<i32>} : memref<4x512xf32, #tpu.memory_space<vmem>>, vector<4x512xf32>,
    return
  }
  func.func @transform_0(%arg0: i32) -> (i32, i32) {
    %c0_i32 = arith.constant 0 : i32
    %c0_i32_0 = arith.constant 0 : i32
    return %arg0, %c0_i32 : i32, i32
  }
  func.func @transform_1(%arg0: i32) -> (i32, i32) {
    %c0_i32 = arith.constant 0 : i32
    %c0_i32_0 = arith.constant 0 : i32
    return %arg0, %c0_i32 : i32, i32
  }
}

</mosaic_0001>

<llo_original>
// kernel: tpu_custom_call.1
$region0: #{tpu_custom_call.1}
  #allocation0 [shape = 'u32[]', space=smem, size = 0x4, offset = 0x4, fixed_abs, tag = 'smem constant byte address 0x4 - core index']
  #allocation1 [shape = 'u32[144,128]{1,0:T(1,128)}', space=vmem, size = 0x12000, scoped, tag = 'internal scratch']
  %s0 = inlined_call_operand.hbm [shape: f32[4,512], index: 0, kind: input, shape index: {}]
  %s1 = inlined_call_operand.hbm [shape: f32[4,512], index: 1, kind: output, shape index: {}]
  %s2 = sld [smem:[#allocation0]]
  $region18: #{tpu_custom_call.1} parent=0
    _
  %s4 = ssub.s32 1, %s2
  %s5 = scalar_select 0, %s4, %s2
  $region1: #{tpu_custom_call.1} parent=0
    #allocation2 [shape = 'u8[8192]{0}', space=vmem, size = 0x2000, scoped, tag = 'input window, operand 0, single buffered']
    #allocation3 [shape = 's32[1]{0}', space=sflag, size = 0x4, scoped, tag = 'scoped memory for tpu_custom_call.1']
    #allocation4 [shape = 's32[1]{0}', space=sflag, size = 0x4, scoped, tag = 'scoped memory for tpu_custom_call.1']
    #allocation5 [shape = 'u8[8192]{0}', space=vmem, size = 0x2000, scoped, tag = 'output window, operand 0, single buffered']
    %6 = vsyncpa [#allocation3], 0
    %7 = vsyncpa [#allocation4], 0
    // Predicated region
    $region2: #{tpu_custom_call.1} parent=1 // pred_check
      _
    $region3: #{tpu_custom_call.1} parent=1 // pred_check_branch
      %9 = sbr.rel (0) target = $region5
    $region4: #{tpu_custom_call.1} parent=1 // pred_region
      %s11 = ssub.s32 256, 256
      %12 = vsyncadd [#allocation3], %s11
      %s14 = sshll.u32 [#allocation2], 4
      %s15 = int_to_ptr.vmem [resolvable:$true] %s14
      %17 = dma.hbm_to_vmem [thread:$0]  %s0, 256, %s15, [#allocation3]
    $region5: #{tpu_custom_call.1} parent=1 // pred_fallthru
      _
    // Predicated region
    $region6: #{tpu_custom_call.1} parent=1 // pred_check
      _
    $region7: #{tpu_custom_call.1} parent=1 // pred_check_branch
      %19 = sbr.rel (0) target = $region9
    $region8: #{tpu_custom_call.1} parent=1 // pred_region
      %20 = dma.done [#allocation3], 256
    $region9: #{tpu_custom_call.1} parent=1 // pred_fallthru
      _
    %v21 = vld [vmem:[#allocation2] sm:$0xff]
    %v22 = vld [vmem:[#allocation2 + $0x8] sm:$0xff]
    %v23 = vadd.f32 %v21, 3.0
    %v24 = vadd.f32 %v22, 3.0
    %v25 = vmax.f32 %v23, 0.0
    %v26 = vmax.f32 %v24, 0.0
    %v27 = vmin.f32 %v25, 6.0
    %v28 = vmin.f32 %v26, 6.0
    %v29 = vrcp.pop 6.0
    %v30 = vmul.f32 %v27, %v29
    %v31 = vmul.f32 %v28, %v29
    %32 = vst [vmem:[#allocation5] sm:$0xff] %v30
    %33 = vst [vmem:[#allocation5 + $0x8] sm:$0xff] %v31
    // Predicated region
    $region10: #{tpu_custom_call.1} parent=1 // pred_check
      _
    $region11: #{tpu_custom_call.1} parent=1 // pred_check_branch
      %35 = sbr.rel (0) target = $region13
    $region12: #{tpu_custom_call.1} parent=1 // pred_region
      %s37 = ssub.s32 256, 256
      %38 = vsyncadd [#allocation4], %s37
      %s40 = sshll.u32 [#allocation5], 4
      %s41 = int_to_ptr.vmem [resolvable:$true] %s40
      %43 = dma.vmem_to_hbm [thread:$0]  %s41, 256, %s1, [#allocation4]
    $region13: #{tpu_custom_call.1} parent=1 // pred_fallthru
      _
    // Predicated region
    $region14: #{tpu_custom_call.1} parent=1 // pred_check
      _
    $region15: #{tpu_custom_call.1} parent=1 // pred_check_branch
      %45 = sbr.rel (0) target = $region17
    $region16: #{tpu_custom_call.1} parent=1 // pred_region
      %46 = dma.done [#allocation4], 256
    $region17: #{tpu_custom_call.1} parent=1 // pred_fallthru
      _
    %47 = vsyncpa [#allocation3], 1
    %48 = vsyncpa [#allocation4], 1

</llo_original>
